<compile_context>
chip_gen: v7x
topology: tpu7x:2x2x1
jax: 0.10.0
libtpu: 0.0.40
codegen_flags: <defaults>
</compile_context>

<pallas_src>
import functools
import math

import jax
import jax.numpy as jnp
from jax import lax
from jax.experimental import pallas as pl
from jax.experimental.pallas import tpu as pltpu


# --------------------------------- helpers --------------------------------- #
def _round_up(x, m):
    return ((x + m - 1) // m) * m


def _sublane_align(dtype):
    # 8 for f32, 16 for bf16, 32 for int8 / fp8
    return max(8, 32 // jnp.dtype(dtype).itemsize)


def _choose_tile(dim, pref, align):
    """Return (tile, padded_dim); tile divides padded_dim.

    dim <= pref -> single full-extent block (always legal).
    Otherwise use the largest aligned divisor in [pref/2, pref]; if none
    exists, pad dim up to a multiple of the preferred tile (avoids both a
    single huge block and degenerate tiny tiles)."""
    if dim <= pref:
        return dim, dim
    best = max(align, (pref // align) * align)
    t = best
    while t >= max(align, best // 2):
        if dim % t == 0:
            return t, dim
        t -= align
    return best, _round_up(dim, best)


def _pick_seq_tile(T, pref):
    """Sequence tile: divisor of T, multiple of 8, <= pref; else full T."""
    if T <= pref:
        return T
    t = (pref // 8) * 8
    while t >= 8:
        if T % t == 0:
            return t
        t -= 8
    return T  # full-extent block is always legal


def _vmem_limit(bytes_needed):
    # Explicit scoped-VMEM limit: above the 16 MiB (v5e) / 32 MiB (v6e/v7x)
    # defaults, with headroom, capped under v7x's 64 MiB physical VMEM.
    return int(min(max(int(bytes_needed * 1.25) + (2 << 20), 32 * 1024 * 1024),
                   60 * 1024 * 1024))


# ---------------------------- tiled linear kernel --------------------------- #
def _linear_kernel(x_ref, w_ref, b_ref, o_ref, acc_ref):
    k = pl.program_id(2)

    @pl.when(k == 0)
    def _():
        acc_ref[...] = jnp.zeros_like(acc_ref)

    acc_ref[...] += jnp.dot(x_ref[...], w_ref[...],
                            preferred_element_type=jnp.float32)

    @pl.when(k == pl.num_programs(2) - 1)
    def _():
        o_ref[...] = (acc_ref[...] + b_ref[...].astype(jnp.float32)
                      ).astype(o_ref.dtype)


def linear(x2d, w, b, *, tm_pref=512, tn_pref=512, tk_pref=512):
    """y = x2d @ w + b   (x2d: (M, K), w: (K, N), b: (N,))."""
    M, K = x2d.shape
    _, N = w.shape
    dt = x2d.dtype

    tm, Mp = _choose_tile(M, tm_pref, _sublane_align(dt))
    tk, Kp = _choose_tile(K, tk_pref, 128)
    tn, Np = _choose_tile(N, tn_pref, 128)

    # zero-pad awkward dims up to a tile multiple (zeros are exact for matmul)
    if (Mp, Kp) != (M, K):
        x2d = jnp.pad(x2d, ((0, Mp - M), (0, Kp - K)))
    if (Kp, Np) != (K, N):
        w = jnp.pad(w, ((0, Kp - K), (0, Np - N)))
    if Np != N:
        b = jnp.pad(b, (0, Np - N))

    itm = jnp.dtype(dt).itemsize
    need = (2 * (tm * tk + tk * tn + tm * tn) + 2 * tn) * itm + tm * tn * 4

    out = pl.pallas_call(
        _linear_kernel,
        out_shape=jax.ShapeDtypeStruct((Mp, Np), dt),
        grid=(Mp // tm, Np // tn, Kp // tk),
        in_specs=[
            pl.BlockSpec((tm, tk), lambda i, j, k: (i, k)),
            pl.BlockSpec((tk, tn), lambda i, j, k: (k, j)),
            pl.BlockSpec((1, tn), lambda i, j, k: (0, j)),
        ],
        out_specs=pl.BlockSpec((tm, tn), lambda i, j, k: (i, j)),
        scratch_shapes=[pltpu.VMEM((tm, tn), jnp.float32)],
        compiler_params=pltpu.CompilerParams(
            dimension_semantics=("parallel", "parallel", "arbitrary"),
            vmem_limit_bytes=_vmem_limit(need)),
    )(x2d, w, b.reshape(1, Np))

    if (Mp, Np) != (M, N):
        out = out[:M, :N]
    return out


# ----------------- qkv split + per-group K/V mean reduction ----------------- #
def _split_group_reduce_kernel(qkv_ref, q_ref, k_ref, v_ref, *,
                               n_head, n_groups, head_dim):
    hd = head_dim
    C = n_head * hd
    G = n_head // n_groups
    inv_g = jnp.float32(1.0 / G)

    # Q pass-through: one lane-dense (tr, C) store.
    q_ref[0] = qkv_ref[0, :, 0:C]

    # Group-mean K/V, computed once per (b, t) row (f32 accumulation).
    for g in range(n_groups):
        h0 = g * G
        ks = qkv_ref[0, :, C + h0 * hd: C + (h0 + 1) * hd].astype(jnp.float32)
        vs = qkv_ref[0, :, 2 * C + h0 * hd: 2 * C + (h0 + 1) * hd].astype(jnp.float32)
        for h in range(h0 + 1, h0 + G):
            ks = ks + qkv_ref[0, :, C + h * hd: C + (h + 1) * hd].astype(jnp.float32)
            vs = vs + qkv_ref[0, :, 2 * C + h * hd: 2 * C + (h + 1) * hd].astype(jnp.float32)
        k_ref[0, :, g * hd:(g + 1) * hd] = (ks * inv_g).astype(k_ref.dtype)
        v_ref[0, :, g * hd:(g + 1) * hd] = (vs * inv_g).astype(v_ref.dtype)


def split_and_group_reduce(qkv, n_head, n_groups, *, tr_pref=256):
    """qkv (B,T,3C) -> q (B,T,C), k_mean (B,T,n_groups*hd), v_mean (B,T,n_groups*hd)."""
    B, T, threeC = qkv.shape
    C = threeC // 3
    hd = C // n_head
    Ckv = n_groups * hd
    tr = _pick_seq_tile(T, tr_pref)

    kernel = functools.partial(_split_group_reduce_kernel, n_head=n_head,
                               n_groups=n_groups, head_dim=hd)
    itm = jnp.dtype(qkv.dtype).itemsize
    need = 2 * (tr * threeC + tr * C + 2 * tr * Ckv) * itm

    return pl.pallas_call(
        kernel,
        out_shape=(jax.ShapeDtypeStruct((B, T, C), qkv.dtype),
                   jax.ShapeDtypeStruct((B, T, Ckv), qkv.dtype),
                   jax.ShapeDtypeStruct((B, T, Ckv), qkv.dtype)),
        grid=(B, T // tr),
        in_specs=[pl.BlockSpec((1, tr, threeC), lambda b, t: (b, t, 0))],
        out_specs=(pl.BlockSpec((1, tr, C), lambda b, t: (b, t, 0)),
                   pl.BlockSpec((1, tr, Ckv), lambda b, t: (b, t, 0)),
                   pl.BlockSpec((1, tr, Ckv), lambda b, t: (b, t, 0))),
        compiler_params=pltpu.CompilerParams(
            dimension_semantics=("parallel", "parallel"),
            vmem_limit_bytes=_vmem_limit(need)),
    )(qkv)


# ------------------------- flash-style GQA attention ------------------------ #
def _flash_gqa_kernel(q_ref, k_ref, v_ref, o_ref, m_ref, l_ref, acc_ref, *,
                      n_head, n_groups, head_dim, scale, tq):
    qi = pl.program_id(1)
    ki = pl.program_id(2)
    hd = head_dim
    G = n_head // n_groups
    NEG = jnp.float32(-1e30)

    @pl.when(ki == 0)
    def _():
        m_ref[...] = jnp.full(m_ref.shape, -jnp.inf, m_ref.dtype)
        l_ref[...] = jnp.zeros(l_ref.shape, l_ref.dtype)
        acc_ref[...] = jnp.zeros(acc_ref.shape, acc_ref.dtype)

    # Causal skip: with tkv == tq, a kv tile with ki > qi is fully masked.
    @pl.when(ki <= qi)
    def _():
        scale_c = jnp.asarray(scale, q_ref.dtype)
        # Global causal mask for this tile (all-True when ki < qi; cheap VPU).
        row = qi * tq + lax.broadcasted_iota(jnp.int32, (tq, tq), 0)
        col = ki * tq + lax.broadcasted_iota(jnp.int32, (tq, tq), 1)
        unmasked = col <= row

        for g in range(n_groups):
            # shared group-mean K/V tile (ref-sliced, loaded once per group)
            k_g = k_ref[0, :, g * hd:(g + 1) * hd]          # (tq, hd)
            v_g = v_ref[0, :, g * hd:(g + 1) * hd]          # (tq, hd)
            # keep the G heads of this group back-to-back so the shared K/V
            # stays resident in the MXU between matmuls
            for h in range(g * G, (g + 1) * G):
                q_h = q_ref[0, :, h * hd:(h + 1) * hd] * scale_c   # (tq, hd)
                s = lax.dot_general(q_h, k_g,
                                    (((1,), (1,)), ((), ())),
                                    preferred_element_type=jnp.float32)  # (tq, tkv)
                s = jnp.where(unmasked, s, NEG)

                m_prev = m_ref[:, h:h + 1]
                l_prev = l_ref[:, h:h + 1]
                m_new = jnp.maximum(m_prev, jnp.max(s, axis=-1, keepdims=True))
                alpha = jnp.exp(m_prev - m_new)
                p = jnp.exp(s - m_new)
                l_ref[:, h:h + 1] = alpha * l_prev + jnp.sum(p, axis=-1,
                                                             keepdims=True)
                pv = jnp.dot(p.astype(v_g.dtype), v_g,
                             preferred_element_type=jnp.float32)   # (tq, hd)
                acc_ref[:, h * hd:(h + 1) * hd] = (
                    alpha * acc_ref[:, h * hd:(h + 1) * hd] + pv)
                m_ref[:, h:h + 1] = m_new

    @pl.when(ki == pl.num_programs(2) - 1)
    def _():
        # normalize the (tq, hd) accumulators (not the (tq, tkv) probabilities)
        inv = pl.reciprocal(l_ref[...], approx=False)       # exact; approx=True
        for h in range(n_head):                             # once bf16 tol is OK
            acc_ref[:, h * hd:(h + 1) * hd] *= inv[:, h:h + 1]
        # single lane-dense (tq, C) store
        o_ref[0] = acc_ref[...].astype(o_ref.dtype)


def gqa_flash_attention(q, k_mean, v_mean, n_head, n_groups, *, tq_pref=256):
    """q (B,T,C), k_mean/v_mean (B,T,n_groups*hd) -> attention output (B,T,C)."""
    B, T, C = q.shape
    hd = C // n_head
    Ckv = k_mean.shape[-1]
    tq = _pick_seq_tile(T, tq_pref)     # tkv == tq (required by the causal skip)
    nq = T // tq

    kernel = functools.partial(_flash_gqa_kernel, n_head=n_head,
                               n_groups=n_groups, head_dim=hd,
                               scale=1.0 / math.sqrt(hd), tq=tq)
    itm = jnp.dtype(q.dtype).itemsize
    need = (2 * (2 * tq * C + 2 * tq * Ckv) * itm        # q/out + k/v double-buffered
            + tq * C * 4 + 2 * tq * 128 * 4)             # f32 acc + m/l scratch

    return pl.pallas_call(
        kernel,
        out_shape=jax.ShapeDtypeStruct((B, T, C), q.dtype),
        grid=(B, nq, nq),
        in_specs=[
            pl.BlockSpec((1, tq, C), lambda b, qi, ki: (b, qi, 0)),
            # clamp skipped (fully-masked) kv tiles back to block qi -> the
            # pipeline sees an unchanged block index and skips the DMA
            pl.BlockSpec((1, tq, Ckv), lambda b, qi, ki: (b, jnp.minimum(ki, qi), 0)),
            pl.BlockSpec((1, tq, Ckv), lambda b, qi, ki: (b, jnp.minimum(ki, qi), 0)),
        ],
        out_specs=pl.BlockSpec((1, tq, C), lambda b, qi, ki: (b, qi, 0)),
        scratch_shapes=[pltpu.VMEM((tq, n_head), jnp.float32),   # running max
                        pltpu.VMEM((tq, n_head), jnp.float32),   # running sum
                        pltpu.VMEM((tq, C), jnp.float32)],       # output acc
        compiler_params=pltpu.CompilerParams(
            dimension_semantics=("parallel", "parallel", "arbitrary"),
            vmem_limit_bytes=_vmem_limit(need)),
    )(q, k_mean, v_mean)


# -------------------------------- full forward ------------------------------ #
def group_query_attention_forward(x, params, n_head, n_groups):
    B, T, C = x.shape
    # fused qkv projection (tiled / pipelined / megacore-shardable)
    qkv = linear(x.reshape(B * T, C), params["w_attn"], params["b_attn"])
    # split q and precompute group-mean K/V once (shrinks attention K/V DMA by G)
    q, k_mean, v_mean = split_and_group_reduce(qkv.reshape(B, T, 3 * C),
                                               n_head, n_groups)
    # flash-style causal GQA attention
    y = gqa_flash_attention(q, k_mean, v_mean, n_head, n_groups)
    # output projection  (dropout = 0.0 -> eval semantics, no-op)
    out = linear(y.reshape(B * T, C), params["w_proj"], params["b_proj"])
    return out.reshape(B, T, C)


# ----------------------------- pure-JAX reference --------------------------- #
def reference_forward(x, params, n_head, n_groups):
    B, T, C = x.shape
    hd = C // n_head
    G = n_head // n_groups
    qkv = x @ params["w_attn"] + params["b_attn"]
    q, k, v = jnp.split(qkv, 3, axis=2)
    q = q.reshape(B, T, n_head, hd).transpose(0, 2, 1, 3)
    k = k.reshape(B, T, n_head, hd).transpose(0, 2, 1, 3)
    v = v.reshape(B, T, n_head, hd).transpose(0, 2, 1, 3)
    k = k.reshape(B, n_groups, G, T, hd).mean(axis=2, keepdims=True)
    k = jnp.broadcast_to(k, (B, n_groups, G, T, hd)).reshape(B, n_head, T, hd)
    v = v.reshape(B, n_groups, G, T, hd).mean(axis=2, keepdims=True)
    v = jnp.broadcast_to(v, (B, n_groups, G, T, hd)).reshape(B, n_head, T, hd)
    att = jnp.einsum("bhqd,bhkd->bhqk", q, k) / math.sqrt(hd)
    mask = jnp.tril(jnp.ones((T, T), dtype=bool))
    att = jnp.where(mask[None, None], att, -jnp.inf)
    att = jax.nn.softmax(att, axis=-1)
    y = jnp.einsum("bhqk,bhkd->bhqd", att, v)
    y = y.transpose(0, 2, 1, 3).reshape(B, T, C)
    return y @ params["w_proj"] + params["b_proj"]


if __name__ == "__main__":
    B, T, C = 2, 16, 64
    n_head, n_groups = 8, 4

    key = jax.random.PRNGKey(0)
    kx, k1, k2, k3, k4 = jax.random.split(key, 5)
    x = jax.random.normal(kx, (B, T, C), jnp.float32)
    params = {
        "w_attn": jax.random.normal(k1, (C, 3 * C), jnp.float32) / math.sqrt(C),
        "b_attn": jax.random.normal(k2, (3 * C,), jnp.float32) * 0.01,
        "w_proj": jax.random.normal(k3, (C, C), jnp.float32) / math.sqrt(C),
        "b_proj": jax.random.normal(k4, (C,), jnp.float32) * 0.01,
    }

    out = group_query_attention_forward(x, params, n_head, n_groups)
    out = jax.block_until_ready(out)

    ref = reference_forward(x, params, n_head, n_groups)
    assert out.shape == (B, T, C)
    assert jnp.allclose(out, ref, atol=2e-4, rtol=2e-4), float(
        jnp.max(jnp.abs(out - ref)))

    print("KERNEL_OK")
</pallas_src>

<mosaic_0001>
module attributes {stable_mosaic.version = 11 : i64} {
  func.func @_linear_kernel(%arg0: i32, %arg1: i32, %arg2: i32, %arg3: memref<32x64xf32, #tpu.memory_space<vmem>>, %arg4: memref<64x192xf32, #tpu.memory_space<vmem>>, %arg5: memref<1x192xf32, #tpu.memory_space<vmem>>, %arg6: memref<32x192xf32, #tpu.memory_space<vmem>>, %arg7: memref<32x192xf32, #tpu.memory_space<vmem>>) attributes {dimension_semantics = [#tpu.dimension_semantics<parallel>, #tpu.dimension_semantics<parallel>, #tpu.dimension_semantics<arbitrary>], iteration_bounds = array<i64: 1, 1, 1>, scalar_prefetch = 0 : i64, scratch_operands = 1 : i64, tpu.core_type = #tpu.core_type<tc>, window_params = [{transform_indices = @transform_0, window_bounds = array<i64: 32, 64>}, {transform_indices = @transform_1, window_bounds = array<i64: 64, 192>}, {transform_indices = @transform_2, window_bounds = array<i64: 1, 192>}, {transform_indices = @transform_3, window_bounds = array<i64: 32, 192>}]} {
    %c0_i32 = arith.constant 0 : i32
    %0 = arith.cmpi eq, %arg2, %c0_i32 : i32
    %1 = arith.extui %0 : i1 to i32
    %c0_i32_0 = arith.constant 0 : i32
    %2 = arith.cmpi ne, %1, %c0_i32_0 : i32
    scf.if %2 {
      %cst_10 = arith.constant 0.000000e+00 : f32
      %12 = vector.broadcast %cst_10 : f32 to vector<32x192xf32>
      %c0_11 = arith.constant 0 : index
      %c0_12 = arith.constant 0 : index
      %13 = vector.load %arg7[%c0_11, %c0_12] : memref<32x192xf32, #tpu.memory_space<vmem>>, vector<32x192xf32>
      tpu.vector_store %arg7[%c0_11, %c0_12], %12 {strides = array<i32>} : memref<32x192xf32, #tpu.memory_space<vmem>>, vector<32x192xf32>,
    } else {
    }
    %c0 = arith.constant 0 : index
    %c0_1 = arith.constant 0 : index
    %3 = vector.load %arg7[%c0, %c0_1] : memref<32x192xf32, #tpu.memory_space<vmem>>, vector<32x192xf32>
    %c0_2 = arith.constant 0 : index
    %c0_3 = arith.constant 0 : index
    %4 = vector.load %arg3[%c0_2, %c0_3] : memref<32x64xf32, #tpu.memory_space<vmem>>, vector<32x64xf32>
    %c0_4 = arith.constant 0 : index
    %c0_5 = arith.constant 0 : index
    %5 = vector.load %arg4[%c0_4, %c0_5] : memref<64x192xf32, #tpu.memory_space<vmem>>, vector<64x192xf32>
    %cst = arith.constant dense<0.000000e+00> : vector<32x192xf32>
    %6 = tpu.matmul %4, %5, %cst {dimension_numbers = #tpu.dot_dimension_numbers<[1], [0], [0], [1], [0, 0, 1, 1], [], []>} : vector<32x64xf32>, vector<64x192xf32>, vector<32x192xf32> -> vector<32x192xf32>
    %7 = arith.addf %3, %6 : vector<32x192xf32>
    %c0_6 = arith.constant 0 : index
    %c0_7 = arith.constant 0 : index
    %8 = vector.load %arg7[%c0_6, %c0_7] : memref<32x192xf32, #tpu.memory_space<vmem>>, vector<32x192xf32>
    tpu.vector_store %arg7[%c0_6, %c0_7], %7 {strides = array<i32>} : memref<32x192xf32, #tpu.memory_space<vmem>>, vector<32x192xf32>,
    %c0_i32_8 = arith.constant 0 : i32
    %9 = arith.cmpi eq, %arg2, %c0_i32_8 : i32
    %10 = arith.extui %9 : i1 to i32
    %c0_i32_9 = arith.constant 0 : i32
    %11 = arith.cmpi ne, %10, %c0_i32_9 : i32
    scf.if %11 {
      %c0_10 = arith.constant 0 : index
      %c0_11 = arith.constant 0 : index
      %12 = vector.load %arg7[%c0_10, %c0_11] : memref<32x192xf32, #tpu.memory_space<vmem>>, vector<32x192xf32>
      %c0_12 = arith.constant 0 : index
      %c0_13 = arith.constant 0 : index
      %13 = vector.load %arg5[%c0_12, %c0_13] : memref<1x192xf32, #tpu.memory_space<vmem>>, vector<1x192xf32>
      %14 = vector.broadcast %13 : vector<1x192xf32> to vector<32x192xf32>
      %15 = arith.addf %12, %14 : vector<32x192xf32>
      %c0_14 = arith.constant 0 : index
      %c0_15 = arith.constant 0 : index
      %16 = vector.load %arg6[%c0_14, %c0_15] : memref<32x192xf32, #tpu.memory_space<vmem>>, vector<32x192xf32>
      tpu.vector_store %arg6[%c0_14, %c0_15], %15 {strides = array<i32>} : memref<32x192xf32, #tpu.memory_space<vmem>>, vector<32x192xf32>,
    } else {
    }
    return
  }
  func.func @transform_0(%arg0: i32, %arg1: i32, %arg2: i32) -> (i32, i32) {
    %c0_i32 = arith.constant 0 : i32
    return %arg0, %arg2 : i32, i32
  }
  func.func @transform_1(%arg0: i32, %arg1: i32, %arg2: i32) -> (i32, i32) {
    %c0_i32 = arith.constant 0 : i32
    return %arg2, %arg1 : i32, i32
  }
  func.func @transform_2(%arg0: i32, %arg1: i32, %arg2: i32) -> (i32, i32) {
    %c0_i32 = arith.constant 0 : i32
    %c0_i32_0 = arith.constant 0 : i32
    return %c0_i32, %arg1 : i32, i32
  }
  func.func @transform_3(%arg0: i32, %arg1: i32, %arg2: i32) -> (i32, i32) {
    %c0_i32 = arith.constant 0 : i32
    return %arg0, %arg1 : i32, i32
  }
}

</mosaic_0001>

<llo_original>
// kernel: tpu_custom_call.1
$region0: #{tpu_custom_call.1}
  #allocation0 [shape = 'u32[]', space=smem, size = 0x4, offset = 0x4, fixed_abs, tag = 'smem constant byte address 0x4 - core index']
  #allocation1 [shape = 'u32[144,128]{1,0:T(1,128)}', space=vmem, size = 0x12000, scoped, tag = 'internal scratch']
  #allocation2 [shape = 'f32[32,192]{1,0:T(8,128)}', space=vmem, size = 0x8000, scoped, tag = 'scratch operand']
  %s0 = inlined_call_operand.hbm [shape: f32[32,64], index: 0, kind: input, shape index: {}]
  %s1 = inlined_call_operand.hbm [shape: f32[64,192], index: 1, kind: input, shape index: {}]
  %s2 = inlined_call_operand.vmem [shape: f32[1,192], index: 2, kind: input, shape index: {}]
  %s3 = inlined_call_operand.hbm [shape: f32[32,192], index: 3, kind: output, shape index: {}]
  %s4 = sld [smem:[#allocation0]]
  $region38: #{tpu_custom_call.1} parent=0
    _
  %s6 = ssub.s32 1, %s4
  %s7 = scalar_select 0, %s6, %s4
  $region1: #{tpu_custom_call.1} parent=0
    #allocation3 [shape = 'u8[16384]{0}', space=vmem, size = 0x4000, scoped, tag = 'input window, operand 0, single buffered']
    #allocation4 [shape = 's32[1]{0}', space=sflag, size = 0x4, scoped, tag = 'scoped memory for tpu_custom_call.1']
    #allocation5 [shape = 's32[1]{0}', space=sflag, size = 0x4, scoped, tag = 'scoped memory for tpu_custom_call.1']
    #allocation6 [shape = 'u8[65536]{0}', space=vmem, size = 0x10000, scoped, tag = 'input window, operand 1, single buffered']
    #allocation7 [shape = 's32[1]{0}', space=sflag, size = 0x4, scoped, tag = 'scoped memory for tpu_custom_call.1']
    #allocation8 [shape = 'u8[32768]{0}', space=vmem, size = 0x8000, scoped, tag = 'output window, operand 0, single buffered']
    %8 = vsyncpa [#allocation4], 0
    %9 = vsyncpa [#allocation7], 0
    %10 = vsyncpa [#allocation5], 0
    // Predicated region
    $region2: #{tpu_custom_call.1} parent=1 // pred_check
      _
    $region3: #{tpu_custom_call.1} parent=1 // pred_check_branch
      %12 = sbr.rel (0) target = $region5
    $region4: #{tpu_custom_call.1} parent=1 // pred_region
      %s14 = ssub.s32 512, 512
      %15 = vsyncadd [#allocation4], %s14
      %s16 = sshll.u32 [#allocation3], 4
      %s17 = int_to_ptr.vmem [resolvable:$true] %s16
      %22 = dma.hbm_to_vmem [thread:$0]  %s0, 512, %s17, [#allocation4], 128, 128, 8
    $region5: #{tpu_custom_call.1} parent=1 // pred_fallthru
      _
    // Predicated region
    $region6: #{tpu_custom_call.1} parent=1 // pred_check
      _
    $region7: #{tpu_custom_call.1} parent=1 // pred_check_branch
      %24 = sbr.rel (0) target = $region9
    $region8: #{tpu_custom_call.1} parent=1 // pred_region
      %s26 = ssub.s32 2048, 2048
      %27 = vsyncadd [#allocation7], %s26
      %s28 = sshll.u32 [#allocation6], 4
      %s29 = int_to_ptr.vmem [resolvable:$true] %s28
      %34 = dma.hbm_to_vmem [thread:$0]  %s1, 2048, %s29, [#allocation7], 256, 256, 16
    $region9: #{tpu_custom_call.1} parent=1 // pred_fallthru
      _
    // Predicated region
    $region10: #{tpu_custom_call.1} parent=1 // pred_check
      _
    $region11: #{tpu_custom_call.1} parent=1 // pred_check_branch
      %36 = sbr.rel (0) target = $region13
    $region12: #{tpu_custom_call.1} parent=1 // pred_region
      _
    $region13: #{tpu_custom_call.1} parent=1 // pred_fallthru
      _
    // Predicated region
    $region14: #{tpu_custom_call.1} parent=1 // pred_check
      _
    $region15: #{tpu_custom_call.1} parent=1 // pred_check_branch
      %38 = sbr.rel (0) target = $region17
    $region16: #{tpu_custom_call.1} parent=1 // pred_region
      %39 = dma.done [#allocation4], 512
    $region17: #{tpu_custom_call.1} parent=1 // pred_fallthru
      _
    // Predicated region
    $region18: #{tpu_custom_call.1} parent=1 // pred_check
      _
    $region19: #{tpu_custom_call.1} parent=1 // pred_check_branch
      %41 = sbr.rel (0) target = $region21
    $region20: #{tpu_custom_call.1} parent=1 // pred_region
      %42 = dma.done [#allocation7], 2048
    $region21: #{tpu_custom_call.1} parent=1 // pred_fallthru
      _
    %p43 = scmp.eq.s32.totalorder 0, 0
    // Predicated region
    $region22: #{tpu_custom_call.1} parent=1 // pred_check
      %p44 = pneg %p43
    $region23: #{tpu_custom_call.1} parent=1 // pred_check_branch
      %46 = sbr.rel (%p44) target = $region25
    $region24: #{tpu_custom_call.1} parent=1 // pred_region
      %47 = vst [vmem:[#allocation2] sm:$0xff] 0.0
      %vm48 = vcmask 523264
      %49 = vst.msk [vmem:[#allocation2 + $0x8] sm:$0xff] %vm48, 0.0
      %50 = vst [vmem:[#allocation2 + $0x10] sm:$0xff] 0.0
      %51 = vst.msk [vmem:[#allocation2 + $0x18] sm:$0xff] %vm48, 0.0
      %52 = vst [vmem:[#allocation2 + $0x20] sm:$0xff] 0.0
      %53 = vst.msk [vmem:[#allocation2 + $0x28] sm:$0xff] %vm48, 0.0
      %54 = vst [vmem:[#allocation2 + $0x30] sm:$0xff] 0.0
      %55 = vst.msk [vmem:[#allocation2 + $0x38] sm:$0xff] %vm48, 0.0
    $region25: #{tpu_custom_call.1} parent=1 // pred_fallthru
      _
    %v56 = vld [vmem:[#allocation2] sm:$0xff]
    %v57 = vld [vmem:[#allocation2 + $0x8] sm:$0xff]
    %v58 = vld [vmem:[#allocation2 + $0x10] sm:$0xff]
    %v59 = vld [vmem:[#allocation2 + $0x18] sm:$0xff]
    %v60 = vld [vmem:[#allocation2 + $0x20] sm:$0xff]
    %v61 = vld [vmem:[#allocation2 + $0x28] sm:$0xff]
    %v62 = vld [vmem:[#allocation2 + $0x30] sm:$0xff]
    %v63 = vld [vmem:[#allocation2 + $0x38] sm:$0xff]
    %v64 = vld [vmem:[#allocation3] sm:$0xff]
    %v65 = vld [vmem:[#allocation3 + $0x8] sm:$0xff]
    %v66 = vld [vmem:[#allocation3 + $0x10] sm:$0xff]
    %v67 = vld [vmem:[#allocation3 + $0x18] sm:$0xff]
    %v68 = vld [vmem:[#allocation6] sm:$0xff]
    %v69 = vld [vmem:[#allocation6 + $0x8] sm:$0xff]
    %v70 = vld [vmem:[#allocation6 + $0x10] sm:$0xff]
    %v71 = vld [vmem:[#allocation6 + $0x18] sm:$0xff]
    %v72 = vld [vmem:[#allocation6 + $0x20] sm:$0xff]
    %v73 = vld [vmem:[#allocation6 + $0x28] sm:$0xff]
    %v74 = vld [vmem:[#allocation6 + $0x30] sm:$0xff]
    %v75 = vld [vmem:[#allocation6 + $0x38] sm:$0xff]
    %v76 = vld [vmem:[#allocation6 + $0x40] sm:$0xff]
    %v77 = vld [vmem:[#allocation6 + $0x48] sm:$0xff]
    %v78 = vld [vmem:[#allocation6 + $0x50] sm:$0xff]
    %v79 = vld [vmem:[#allocation6 + $0x58] sm:$0xff]
    %v80 = vld [vmem:[#allocation6 + $0x60] sm:$0xff]
    %v81 = vld [vmem:[#allocation6 + $0x68] sm:$0xff]
    %v82 = vld [vmem:[#allocation6 + $0x70] sm:$0xff]
    %v83 = vld [vmem:[#allocation6 + $0x78] sm:$0xff]
    %vm84 = vcmask 523264
    %v86 = vsel %vm84, %v64, 0
    %v89 = vsel %vm84, %v65, 0
    %v92 = vsel %vm84, %v66, 0
    %v95 = vsel %vm84, %v67, 0
    %97 = vmatprep.subr.mxu0 %v69
    %98 = vmatpush1.msra.mxu0 %v68
    %99 = vmatprep.subr.mxu0 %v71
    %100 = vmatpush1.msra.mxu0 %v70
    %101 = vmatprep.subr.mxu0 %v73
    %102 = vmatpush1.msra.mxu0 %v72
    %103 = vmatprep.subr.mxu0 %v75
    %104 = vmatpush1.msra.mxu0 %v74
    %105 = vmatprep.subr.mxu0 %v77
    %106 = vmatpush1.msra.mxu0 %v76
    %107 = vmatprep.subr.mxu0 %v79
    %108 = vmatpush1.msra.mxu0 %v78
    %109 = vmatprep.subr.mxu0 %v81
    %110 = vmatpush1.msra.mxu0 %v80
    %111 = vmatprep.subr.mxu0 %v83
    %112 = vmatpush1.msra.mxu0 %v82
    %113 = vmatprep.subr.mxu0 0.0
    %114 = vmatpush1.msra.mxu0 0.0
    %115 = vmatprep.subr.mxu0 0.0
    %116 = vmatpush1.msra.mxu0 0.0
    %117 = vmatprep.subr.mxu0 0.0
    %118 = vmatpush1.msra.mxu0 0.0
    %119 = vmatprep.subr.mxu0 0.0
    %120 = vmatpush1.msra.mxu0 0.0
    %121 = vmatprep.subr.mxu0 0.0
    %122 = vmatpush1.msra.mxu0 0.0
    %123 = vmatprep.subr.mxu0 0.0
    %124 = vmatpush1.msra.mxu0 0.0
    %125 = vmatprep.subr.mxu0 0.0
    %126 = vmatpush1.msra.mxu0 0.0
    %127 = vmatprep.subr.mxu0 0.0
    %128 = vmatpush1.msra.mxu0 0.0
    %129 = vmatprep.subr.mxu0 0.0
    %130 = vmatpush1.msra.mxu0 0.0
    %131 = vmatprep.subr.mxu0 0.0
    %132 = vmatpush1.msra.mxu0 0.0
    %133 = vmatprep.subr.mxu0 0.0
    %134 = vmatpush1.msra.mxu0 0.0
    %135 = vmatprep.subr.mxu0 0.0
    %136 = vmatpush1.msra.mxu0 0.0
    %137 = vmatprep.subr.mxu0 0.0
    %138 = vmatpush1.msra.mxu0 0.0
    %139 = vmatprep.subr.mxu0 0.0
    %140 = vmatpush1.msra.mxu0 0.0
    %141 = vmatprep.subr.mxu0 0.0
    %142 = vmatpush1.msra.mxu0 0.0
    %143 = vmatprep.subr.mxu0 0.0
    %144 = vmatpush1.msra.mxu0 0.0
    %145 = vmatprep.subr.mxu0 0.0
    %146 = vmatpush1.msra.mxu0 0.0
    %147 = vmatprep.subr.mxu0 0.0
    %148 = vmatpush1.msra.mxu0 0.0
    %149 = vmatprep.subr.mxu0 0.0
    %150 = vmatpush1.msra.mxu0 0.0
    %151 = vmatprep.subr.mxu0 0.0
    %152 = vmatpush1.msra.mxu0 0.0
    %153 = vmatprep.subr.mxu0 0.0
    %154 = vmatpush1.msra.mxu0 0.0
    %155 = vmatprep.subr.mxu0 0.0
    %156 = vmatpush1.msra.mxu0 0.0
    %157 = vmatprep.subr.mxu0 0.0
    %158 = vmatpush1.msra.mxu0 0.0
    %159 = vmatprep.subr.mxu0 0.0
    %160 = vmatpush1.msra.mxu0 0.0
    %161 = vmatprep.mubr.f32.mxu0 0.0
    %162 = vmatmul.mubr.f32.gmra.mrb[0].mxu0 %v86
    %v163 = vpop.f32.mrb[0].mxu0
    %v164 = vadd.f32 0.0, %v163
    %v165 = vpop.f32.mrb[0].mxu0
    %v166 = vadd.f32 0.0, %v165
    %167 = vmatprep.mubr.f32.mxu0 0.0
    %168 = vmatmul.mubr.f32.gmra.mrb[0].mxu0 %v89
    %v169 = vpop.f32.mrb[0].mxu0
    %v170 = vadd.f32 0.0, %v169
    %v171 = vpop.f32.mrb[0].mxu0
    %v172 = vadd.f32 0.0, %v171
    %173 = vmatprep.mubr.f32.mxu0 0.0
    %174 = vmatmul.mubr.f32.gmra.mrb[0].mxu0 %v92
    %v175 = vpop.f32.mrb[0].mxu0
    %v176 = vadd.f32 0.0, %v175
    %v177 = vpop.f32.mrb[0].mxu0
    %v178 = vadd.f32 0.0, %v177
    %179 = vmatprep.mubr.f32.mxu0 0.0
    %180 = vmatmul.mubr.f32.gmra.mrb[0].mxu0 %v95
    %v181 = vpop.f32.mrb[0].mxu0
    %v182 = vadd.f32 0.0, %v181
    %v183 = vpop.f32.mrb[0].mxu0
    %v184 = vadd.f32 0.0, %v183
    %185 = vdwg.mxu0
    %v186 = vadd.f32 %v56, %v164
    %v187 = vadd.f32 %v57, %v166
    %v188 = vadd.f32 %v58, %v170
    %v189 = vadd.f32 %v59, %v172
    %v190 = vadd.f32 %v60, %v176
    %v191 = vadd.f32 %v61, %v178
    %v192 = vadd.f32 %v62, %v182
    %v193 = vadd.f32 %v63, %v184
    %194 = vst [vmem:[#allocation2] sm:$0xff] %v186
    %195 = vst.msk [vmem:[#allocation2 + $0x8] sm:$0xff] %vm84, %v187
    %196 = vst [vmem:[#allocation2 + $0x10] sm:$0xff] %v188
    %197 = vst.msk [vmem:[#allocation2 + $0x18] sm:$0xff] %vm84, %v189
    %198 = vst [vmem:[#allocation2 + $0x20] sm:$0xff] %v190
    %199 = vst.msk [vmem:[#allocation2 + $0x28] sm:$0xff] %vm84, %v191
    %200 = vst [vmem:[#allocation2 + $0x30] sm:$0xff] %v192
    %201 = vst.msk [vmem:[#allocation2 + $0x38] sm:$0xff] %vm84, %v193
    // Predicated region
    $region26: #{tpu_custom_call.1} parent=1 // pred_check
      %p202 = pneg %p43
    $region27: #{tpu_custom_call.1} parent=1 // pred_check_branch
      %204 = sbr.rel (%p202) target = $region29
    $region28: #{tpu_custom_call.1} parent=1 // pred_region
      %v205 = vld [vmem:[#allocation2] sm:$0xff]
      %v206 = vld [vmem:[#allocation2 + $0x8] sm:$0xff]
      %v207 = vld [vmem:[#allocation2 + $0x10] sm:$0xff]
      %v208 = vld [vmem:[#allocation2 + $0x18] sm:$0xff]
      %v209 = vld [vmem:[#allocation2 + $0x20] sm:$0xff]
      %v210 = vld [vmem:[#allocation2 + $0x28] sm:$0xff]
      %v211 = vld [vmem:[#allocation2 + $0x30] sm:$0xff]
      %v212 = vld [vmem:[#allocation2 + $0x38] sm:$0xff]
      %v213 = vld [vmem:[%s2] sm:$0x3]
      %v215 = vlaneseq
      %v216 = vshrl.u32 %v215, 7
      %v217 = vsub.s32 0, %v216
      %v218 = vrot.slane %v213, %v217
      %v219 = vlaneseq
      %v220 = vshrl.u32 %v219, 7
      %v221 = vsub.s32 1, %v220
      %v222 = vrot.slane %v213, %v221
      %v225 = vadd.f32 %v205, %v218
      %v226 = vadd.f32 %v206, %v222
      %v227 = vadd.f32 %v207, %v218
      %v228 = vadd.f32 %v208, %v222
      %v229 = vadd.f32 %v209, %v218
      %v230 = vadd.f32 %v210, %v222
      %v231 = vadd.f32 %v211, %v218
      %v232 = vadd.f32 %v212, %v222
      %233 = vst [vmem:[#allocation8] sm:$0xff] %v225
      %234 = vst.msk [vmem:[#allocation8 + $0x8] sm:$0xff] %vm84, %v226
      %235 = vst [vmem:[#allocation8 + $0x10] sm:$0xff] %v227
      %236 = vst.msk [vmem:[#allocation8 + $0x18] sm:$0xff] %vm84, %v228
      %237 = vst [vmem:[#allocation8 + $0x20] sm:$0xff] %v229
      %238 = vst.msk [vmem:[#allocation8 + $0x28] sm:$0xff] %vm84, %v230
      %239 = vst [vmem:[#allocation8 + $0x30] sm:$0xff] %v231
      %240 = vst.msk [vmem:[#allocation8 + $0x38] sm:$0xff] %vm84, %v232
    $region29: #{tpu_custom_call.1} parent=1 // pred_fallthru
      _
    // Predicated region
    $region30: #{tpu_custom_call.1} parent=1 // pred_check
      _
    $region31: #{tpu_custom_call.1} parent=1 // pred_check_branch
      %242 = sbr.rel (0) target = $region33
    $region32: #{tpu_custom_call.1} parent=1 // pred_region
      %s244 = ssub.s32 1024, 1024
      %245 = vsyncadd [#allocation5], %s244
      %s246 = sshll.u32 [#allocation8], 4
      %s247 = int_to_ptr.vmem [resolvable:$true] %s246
      %252 = dma.vmem_to_hbm [thread:$0]  %s247, 1024, %s3, [#allocation5], 256, 256, 16
    $region33: #{tpu_custom_call.1} parent=1 // pred_fallthru
      _
    // Predicated region
    $region34: #{tpu_custom_call.1} parent=1 // pred_check
      _
    $region35: #{tpu_custom_call.1} parent=1 // pred_check_branch
      %254 = sbr.rel (0) target = $region37
    $region36: #{tpu_custom_call.1} parent=1 // pred_region
      %255 = dma.done [#allocation5], 1024
    $region37: #{tpu_custom_call.1} parent=1 // pred_fallthru
      _
    %256 = vsyncpa [#allocation4], 1
    %257 = vsyncpa [#allocation7], 1
    %258 = vsyncpa [#allocation5], 1

</llo_original>
